<compile_context>
chip_gen: v7x
topology: tpu7x:2x2x1
jax: 0.10.0
libtpu: 0.0.40
codegen_flags: <defaults>
</compile_context>

<pallas_src>
import jax
import jax.numpy as jnp
from jax.experimental import pallas as pl
from jax.experimental.pallas import tpu as pltpu


_INV_SQRT2 = 0.7071067811865476  # 1/sqrt(2); exact-erf GELU (torch.nn.GELU default)


def _round_up(a: int, b: int) -> int:
    return (a + b - 1) // b * b


def _halve_to_multiple(v: int, m: int) -> int:
    return max(m, (v // 2) // m * m)


def _tpu_vmem_capacity() -> int:
    try:
        return int(pltpu.get_tpu_info().vmem_capacity_bytes)
    except Exception:
        return 64 << 20  # conservative (v7x-sized) fallback


def _pad2d(a, rows: int, cols: int):
    r, c = a.shape
    if (r, c) == (rows, cols):
        return a  # already aligned: no padding copy
    return jnp.zeros((rows, cols), a.dtype).at[:r, :c].set(a)


def _mlp_kernel(x_ref, w1_ref, b1_ref, w2_ref, b2_ref, o_ref, acc_ref):
    # x_ref : (tm, d_in_p)        native dtype (f32 / bf16)
    # w1_ref: (d_in_p, th)        native dtype, hidden slice k
    # b1_ref: (n_k, th)           fully resident; row k = bias slice for hidden slice k
    # w2_ref: (th, d_out_p)       native dtype, hidden slice k
    # b2_ref: (1, d_out_p)
    # o_ref : (tm, d_out_p)
    # acc_ref: (tm, d_out_p) f32 scratch, resident across the hidden (k) axis
    k = pl.program_id(1)

    @pl.when(k == 0)
    def _init():
        acc_ref[...] = jnp.zeros_like(acc_ref)

    # fc1 slice on the MXU: native-dtype operands, f32 accumulation.
    h = jnp.dot(x_ref[...], w1_ref[...], preferred_element_type=jnp.float32)
    h = h + b1_ref[pl.ds(k, 1), :].astype(jnp.float32)

    # Exact GELU: 0.5 * x * (1 + erf(x / sqrt(2)))  (matches torch.nn.GELU default).
    h = 0.5 * h * (1.0 + jax.lax.erf(h * jnp.float32(_INV_SQRT2)))

    # dropout(p=0.0) is the identity -> skipped.

    # fc2 contribution of this hidden slice, accumulated in f32.
    acc_ref[...] += jnp.dot(h.astype(w2_ref.dtype), w2_ref[...],
                            preferred_element_type=jnp.float32)

    @pl.when(k == pl.num_programs(1) - 1)
    def _finalize():
        o_ref[...] = (acc_ref[...] + b2_ref[...].astype(jnp.float32)).astype(o_ref.dtype)


def mlp_pallas(x, w1, b1, w2, b2, *, tm=None, th=None):
    """x: (M, d_in). w1: (d_in, d_h), b1: (d_h,)/(1,d_h), w2: (d_h, d_out), b2 likewise.

    Returns (M, d_out) in x.dtype. Handles ragged M and non-128-multiple feature dims
    by zero-padding in plain JAX (exact) and slicing the result; padding is skipped
    when shapes are already aligned.
    """
    M, d_in = x.shape
    d_in_w, d_h = w1.shape
    d_h_w, d_out = w2.shape
    assert d_in_w == d_in and d_h_w == d_h

    b1 = jnp.reshape(b1, (1, d_h))
    b2 = jnp.reshape(b2, (1, d_out))

    x_isz = jnp.dtype(x.dtype).itemsize
    w_isz = jnp.dtype(w1.dtype).itemsize
    # dtype-aware minimum second-to-last tile (8 f32 / 16 bf16 / 32 int8-fp8).
    min_sub = {4: 8, 2: 16, 1: 32}.get(x_isz, 8)

    vmem_cap = _tpu_vmem_capacity()
    big_vmem = vmem_cap >= (100 << 20)          # v5e / v6e (128 MiB) vs v7x (64 MiB)

    d_in_p = _round_up(d_in, 128)
    d_out_p = _round_up(d_out, 128)

    # Generation-aware tile targets (user override via kwargs).
    tm_target = tm if tm is not None else (512 if big_vmem else 256)
    th_target = th if th is not None else 512
    tm_sel = min(tm_target, _round_up(M, min_sub))
    th_sel = min(th_target, _round_up(d_h, 128))

    headroom = (16 << 20) if big_vmem else (8 << 20)
    budget = vmem_cap - headroom

    def est(tm_, th_):
        n_k_ = _round_up(d_h, th_) // th_
        return (2 * tm_ * d_in_p * x_isz              # x tile (double-buffered)
                + 2 * d_in_p * th_ * w_isz            # W1 hidden slice
                + 2 * th_ * d_out_p * w_isz           # W2 hidden slice
                + _round_up(n_k_, 8) * th_ * w_isz    # b1 (resident, sublane-padded)
                + 2 * 8 * d_out_p * w_isz             # b2
                + 2 * tm_ * d_out_p * x_isz           # output tile
                + tm_ * d_out_p * 4                   # f32 accumulator scratch
                + 2 * tm_ * th_ * 4)                  # f32 fc1 intermediate / erf temps

    # Shrink th first, then tm, until the working set fits the VMEM budget.
    while est(tm_sel, th_sel) > budget and (th_sel > 128 or tm_sel > max(128, min_sub)):
        if th_sel > 128:
            th_sel = _halve_to_multiple(th_sel, 128)
        else:
            tm_sel = _halve_to_multiple(tm_sel, min_sub)

    M_p = _round_up(M, tm_sel)
    # v7x-class chips have 2 TensorCores: keep >=2 tiles on the parallel axis when M allows.
    if not big_vmem:
        while M_p // tm_sel < 2 and tm_sel >= 2 * max(128, min_sub):
            tm_sel = _halve_to_multiple(tm_sel, min_sub)
            M_p = _round_up(M, tm_sel)

    d_h_p = _round_up(d_h, th_sel)
    n_k = d_h_p // th_sel
    m_tiles = M_p // tm_sel

    # Zero-pad only when needed (exact: padded x cols hit padded W1 rows = 0; padded hidden
    # units hit zero W2 rows; padded output columns are sliced off below).
    x_p = _pad2d(x, M_p, d_in_p)
    w1_p = _pad2d(w1, d_in_p, d_h_p)
    w2_p = _pad2d(w2, d_h_p, d_out_p)
    b1_p = _pad2d(b1, 1, d_h_p).reshape(n_k, th_sel)
    b2_p = _pad2d(b2, 1, d_out_p)

    # Generation-aware VMEM limit derived from the selected tiles.
    vmem_limit = int(min(max(est(tm_sel, th_sel) + (4 << 20), 32 << 20),
                         vmem_cap - (4 << 20)))

    # Advisory cost estimate for XLA's scheduler.
    flops = 2 * M * d_h * (d_in + d_out)
    bytes_accessed = (M_p * d_in_p * x_isz + M_p * d_out_p * x_isz
                      + m_tiles * (d_in_p * d_h_p + d_h_p * d_out_p) * w_isz
                      + (n_k * th_sel + d_out_p) * w_isz)
    cost = pl.CostEstimate(flops=int(flops), transcendentals=int(M * d_h),
                           bytes_accessed=int(bytes_accessed))

    out_p = pl.pallas_call(
        _mlp_kernel,
        out_shape=jax.ShapeDtypeStruct((M_p, d_out_p), x.dtype),
        grid_spec=pltpu.PrefetchScalarGridSpec(
            num_scalar_prefetch=0,
            grid=(m_tiles, n_k),
            in_specs=[
                pl.BlockSpec((tm_sel, d_in_p), lambda i, k: (i, 0)),    # x tile
                pl.BlockSpec((d_in_p, th_sel), lambda i, k: (0, k)),    # W1 hidden slice
                pl.BlockSpec((n_k, th_sel), lambda i, k: (0, 0)),       # b1 (fully resident)
                pl.BlockSpec((th_sel, d_out_p), lambda i, k: (k, 0)),   # W2 hidden slice
                pl.BlockSpec((1, d_out_p), lambda i, k: (0, 0)),        # b2
            ],
            out_specs=pl.BlockSpec((tm_sel, d_out_p), lambda i, k: (i, 0)),
            scratch_shapes=[pltpu.VMEM((tm_sel, d_out_p), jnp.float32)],
        ),
        compiler_params=pltpu.CompilerParams(
            dimension_semantics=("parallel", "arbitrary"),
            vmem_limit_bytes=vmem_limit,
        ),
        cost_estimate=cost,
    )(x_p, w1_p, b1_p, w2_p, b2_p)

    if (M_p, d_out_p) == (M, d_out):
        return out_p
    return out_p[:M, :d_out]


def mlp_reference(x, w1, b1, w2, b2):
    h = x.astype(jnp.float32) @ w1.astype(jnp.float32) + b1.reshape(1, -1).astype(jnp.float32)
    h = 0.5 * h * (1.0 + jax.lax.erf(h * _INV_SQRT2))
    out = h @ w2.astype(jnp.float32) + b2.reshape(1, -1).astype(jnp.float32)
    return out.astype(x.dtype)


if __name__ == "__main__":
    key = jax.random.PRNGKey(0)
    k_x, k_w1, k_b1, k_w2, k_b2 = jax.random.split(key, 5)

    # Small shapes consistent with the module: batch=2, seq=8 tokens,
    # in_features=32, hidden_features=64, out_features=32.
    batch, seq = 2, 8
    d_in, d_h, d_out = 32, 64, 32

    x = jax.random.normal(k_x, (batch, seq, d_in), dtype=jnp.float32)

    # Deterministic parameter init (torch.nn.Linear-style uniform ranges).
    w1 = jax.random.uniform(k_w1, (d_in, d_h), jnp.float32,
                            -1.0 / jnp.sqrt(d_in), 1.0 / jnp.sqrt(d_in))
    b1 = jax.random.uniform(k_b1, (1, d_h), jnp.float32,
                            -1.0 / jnp.sqrt(d_in), 1.0 / jnp.sqrt(d_in))
    w2 = jax.random.uniform(k_w2, (d_h, d_out), jnp.float32,
                            -1.0 / jnp.sqrt(d_h), 1.0 / jnp.sqrt(d_h))
    b2 = jax.random.uniform(k_b2, (1, d_out), jnp.float32,
                            -1.0 / jnp.sqrt(d_h), 1.0 / jnp.sqrt(d_h))

    # Flatten tokens (glue in plain JAX), run fused kernel, restore shape.
    x2d = x.reshape(batch * seq, d_in)
    out2d = mlp_pallas(x2d, w1, b1, w2, b2)
    out = out2d.reshape(batch, seq, d_out)
    jax.block_until_ready(out)

    # Correctness check against pure-JAX reference.
    ref = mlp_reference(x2d, w1, b1, w2, b2).reshape(batch, seq, d_out)
    assert jnp.allclose(out, ref, atol=1e-5, rtol=1e-5), "mismatch vs reference"

    print("KERNEL_OK")
</pallas_src>

<mosaic_0001>
module attributes {stable_mosaic.version = 11 : i64} {
  func.func @_mlp_kernel(%arg0: i32, %arg1: i32, %arg2: memref<16x128xf32, #tpu.memory_space<vmem>>, %arg3: memref<128x128xf32, #tpu.memory_space<vmem>>, %arg4: memref<1x128xf32, #tpu.memory_space<vmem>>, %arg5: memref<128x128xf32, #tpu.memory_space<vmem>>, %arg6: memref<1x128xf32, #tpu.memory_space<vmem>>, %arg7: memref<16x128xf32, #tpu.memory_space<vmem>>, %arg8: memref<16x128xf32, #tpu.memory_space<vmem>>) attributes {dimension_semantics = [#tpu.dimension_semantics<parallel>, #tpu.dimension_semantics<arbitrary>], iteration_bounds = array<i64: 1, 1>, scalar_prefetch = 0 : i64, scratch_operands = 1 : i64, tpu.core_type = #tpu.core_type<tc>, window_params = [{transform_indices = @transform_0, window_bounds = array<i64: 16, 128>}, {transform_indices = @transform_1, window_bounds = array<i64: 128, 128>}, {pipeline_mode = #tpu.pipeline_mode<synchronous>, transform_indices = @transform_2, window_bounds = array<i64: 1, 128>}, {transform_indices = @transform_3, window_bounds = array<i64: 128, 128>}, {pipeline_mode = #tpu.pipeline_mode<synchronous>, transform_indices = @transform_4, window_bounds = array<i64: 1, 128>}, {transform_indices = @transform_5, window_bounds = array<i64: 16, 128>}]} {
    %c0_i32 = arith.constant 0 : i32
    %0 = arith.cmpi eq, %arg1, %c0_i32 : i32
    %1 = arith.extui %0 : i1 to i32
    %c0_i32_0 = arith.constant 0 : i32
    %2 = arith.cmpi ne, %1, %c0_i32_0 : i32
    scf.if %2 {
      %cst_17 = arith.constant 0.000000e+00 : f32
      %26 = vector.broadcast %cst_17 : f32 to vector<16x128xf32>
      %c0_18 = arith.constant 0 : index
      %c0_19 = arith.constant 0 : index
      %27 = vector.load %arg8[%c0_18, %c0_19] : memref<16x128xf32, #tpu.memory_space<vmem>>, vector<16x128xf32>
      tpu.vector_store %arg8[%c0_18, %c0_19], %26 {strides = array<i32>} : memref<16x128xf32, #tpu.memory_space<vmem>>, vector<16x128xf32>,
    } else {
    }
    %c0 = arith.constant 0 : index
    %c0_1 = arith.constant 0 : index
    %3 = vector.load %arg2[%c0, %c0_1] : memref<16x128xf32, #tpu.memory_space<vmem>>, vector<16x128xf32>
    %c0_2 = arith.constant 0 : index
    %c0_3 = arith.constant 0 : index
    %4 = vector.load %arg3[%c0_2, %c0_3] : memref<128x128xf32, #tpu.memory_space<vmem>>, vector<128x128xf32>
    %cst = arith.constant dense<0.000000e+00> : vector<16x128xf32>
    %5 = tpu.matmul %3, %4, %cst {dimension_numbers = #tpu.dot_dimension_numbers<[1], [0], [0], [1], [0, 0, 1, 1], [], []>} : vector<16x128xf32>, vector<128x128xf32>, vector<16x128xf32> -> vector<16x128xf32>
    %6 = arith.index_cast %arg1 : i32 to index
    %c0_4 = arith.constant 0 : index
    %7 = vector.load %arg4[%6, %c0_4] : memref<1x128xf32, #tpu.memory_space<vmem>>, vector<1x128xf32>
    %8 = vector.broadcast %7 : vector<1x128xf32> to vector<16x128xf32>
    %9 = arith.addf %5, %8 : vector<16x128xf32>
    %cst_5 = arith.constant 5.000000e-01 : f32
    %10 = vector.broadcast %cst_5 : f32 to vector<16x128xf32>
    %11 = arith.mulf %10, %9 : vector<16x128xf32>
    %cst_6 = arith.constant 0.707106769 : f32
    %12 = vector.broadcast %cst_6 : f32 to vector<16x128xf32>
    %13 = arith.mulf %9, %12 : vector<16x128xf32>
    %14 = math.erf %13 : vector<16x128xf32>
    %cst_7 = arith.constant 1.000000e+00 : f32
    %15 = vector.broadcast %cst_7 : f32 to vector<16x128xf32>
    %16 = arith.addf %15, %14 : vector<16x128xf32>
    %17 = arith.mulf %11, %16 : vector<16x128xf32>
    %c0_8 = arith.constant 0 : index
    %c0_9 = arith.constant 0 : index
    %18 = vector.load %arg8[%c0_8, %c0_9] : memref<16x128xf32, #tpu.memory_space<vmem>>, vector<16x128xf32>
    %c0_10 = arith.constant 0 : index
    %c0_11 = arith.constant 0 : index
    %19 = vector.load %arg5[%c0_10, %c0_11] : memref<128x128xf32, #tpu.memory_space<vmem>>, vector<128x128xf32>
    %cst_12 = arith.constant dense<0.000000e+00> : vector<16x128xf32>
    %20 = tpu.matmul %17, %19, %cst_12 {dimension_numbers = #tpu.dot_dimension_numbers<[1], [0], [0], [1], [0, 0, 1, 1], [], []>} : vector<16x128xf32>, vector<128x128xf32>, vector<16x128xf32> -> vector<16x128xf32>
    %21 = arith.addf %18, %20 : vector<16x128xf32>
    %c0_13 = arith.constant 0 : index
    %c0_14 = arith.constant 0 : index
    %22 = vector.load %arg8[%c0_13, %c0_14] : memref<16x128xf32, #tpu.memory_space<vmem>>, vector<16x128xf32>
    tpu.vector_store %arg8[%c0_13, %c0_14], %21 {strides = array<i32>} : memref<16x128xf32, #tpu.memory_space<vmem>>, vector<16x128xf32>,
    %c0_i32_15 = arith.constant 0 : i32
    %23 = arith.cmpi eq, %arg1, %c0_i32_15 : i32
    %24 = arith.extui %23 : i1 to i32
    %c0_i32_16 = arith.constant 0 : i32
    %25 = arith.cmpi ne, %24, %c0_i32_16 : i32
    scf.if %25 {
      %c0_17 = arith.constant 0 : index
      %c0_18 = arith.constant 0 : index
      %26 = vector.load %arg8[%c0_17, %c0_18] : memref<16x128xf32, #tpu.memory_space<vmem>>, vector<16x128xf32>
      %c0_19 = arith.constant 0 : index
      %c0_20 = arith.constant 0 : index
      %27 = vector.load %arg6[%c0_19, %c0_20] : memref<1x128xf32, #tpu.memory_space<vmem>>, vector<1x128xf32>
      %28 = vector.broadcast %27 : vector<1x128xf32> to vector<16x128xf32>
      %29 = arith.addf %26, %28 : vector<16x128xf32>
      %c0_21 = arith.constant 0 : index
      %c0_22 = arith.constant 0 : index
      %30 = vector.load %arg7[%c0_21, %c0_22] : memref<16x128xf32, #tpu.memory_space<vmem>>, vector<16x128xf32>
      tpu.vector_store %arg7[%c0_21, %c0_22], %29 {strides = array<i32>} : memref<16x128xf32, #tpu.memory_space<vmem>>, vector<16x128xf32>,
    } else {
    }
    return
  }
  func.func @transform_0(%arg0: i32, %arg1: i32) -> (i32, i32) {
    %c0_i32 = arith.constant 0 : i32
    %c0_i32_0 = arith.constant 0 : i32
    return %arg0, %c0_i32 : i32, i32
  }
  func.func @transform_1(%arg0: i32, %arg1: i32) -> (i32, i32) {
    %c0_i32 = arith.constant 0 : i32
    %c0_i32_0 = arith.constant 0 : i32
    return %c0_i32, %arg1 : i32, i32
  }
  func.func @transform_2(%arg0: i32, %arg1: i32) -> (i32, i32) {
    %c0_i32 = arith.constant 0 : i32
    %c0_i32_0 = arith.constant 0 : i32
    %c0_i32_1 = arith.constant 0 : i32
    return %c0_i32, %c0_i32_0 : i32, i32
  }
  func.func @transform_3(%arg0: i32, %arg1: i32) -> (i32, i32) {
    %c0_i32 = arith.constant 0 : i32
    %c0_i32_0 = arith.constant 0 : i32
    return %arg1, %c0_i32 : i32, i32
  }
  func.func @transform_4(%arg0: i32, %arg1: i32) -> (i32, i32) {
    %c0_i32 = arith.constant 0 : i32
    %c0_i32_0 = arith.constant 0 : i32
    %c0_i32_1 = arith.constant 0 : i32
    return %c0_i32, %c0_i32_0 : i32, i32
  }
  func.func @transform_5(%arg0: i32, %arg1: i32) -> (i32, i32) {
    %c0_i32 = arith.constant 0 : i32
    %c0_i32_0 = arith.constant 0 : i32
    return %arg0, %c0_i32 : i32, i32
  }
}

</mosaic_0001>

<llo_original>
// kernel: tpu_custom_call.1
$region0: #{tpu_custom_call.1}
  #allocation0 [shape = 'u32[]', space=smem, size = 0x4, offset = 0x4, fixed_abs, tag = 'smem constant byte address 0x4 - core index']
  #allocation1 [shape = 'u32[144,128]{1,0:T(1,128)}', space=vmem, size = 0x12000, scoped, tag = 'internal scratch']
  #allocation2 [shape = 'f32[16,128]{1,0:T(8,128)}', space=vmem, size = 0x2000, scoped, tag = 'scratch operand']
  %s0 = inlined_call_operand.hbm [shape: f32[16,128], index: 0, kind: input, shape index: {}]
  %s1 = inlined_call_operand.hbm [shape: f32[128,128], index: 1, kind: input, shape index: {}]
  %s2 = inlined_call_operand.vmem [shape: f32[1,128], index: 2, kind: input, shape index: {}]
  %s3 = inlined_call_operand.hbm [shape: f32[128,128], index: 3, kind: input, shape index: {}]
  %s4 = inlined_call_operand.vmem [shape: f32[1,128], index: 4, kind: input, shape index: {}]
  %s5 = inlined_call_operand.hbm [shape: f32[16,128], index: 5, kind: output, shape index: {}]
  %s6 = sld [smem:[#allocation0]]
  $region50: #{tpu_custom_call.1} parent=0
    _
  %s8 = ssub.s32 1, %s6
  %s9 = scalar_select 0, %s8, %s6
  $region1: #{tpu_custom_call.1} parent=0
    #allocation3 [shape = 'u8[8192]{0}', space=vmem, size = 0x2000, scoped, tag = 'input window, operand 0, single buffered']
    #allocation4 [shape = 's32[1]{0}', space=sflag, size = 0x4, scoped, tag = 'scoped memory for tpu_custom_call.1']
    #allocation5 [shape = 's32[1]{0}', space=sflag, size = 0x4, scoped, tag = 'scoped memory for tpu_custom_call.1']
    #allocation6 [shape = 'u8[65536]{0}', space=vmem, size = 0x10000, scoped, tag = 'input window, operand 1, single buffered']
    #allocation7 [shape = 's32[1]{0}', space=sflag, size = 0x4, scoped, tag = 'scoped memory for tpu_custom_call.1']
    #allocation8 [shape = 'u8[65536]{0}', space=vmem, size = 0x10000, scoped, tag = 'input window, operand 3, single buffered']
    #allocation9 [shape = 'u8[8192]{0}', space=vmem, size = 0x2000, scoped, tag = 'output window, operand 0, single buffered']
    %10 = vsyncpa [#allocation4], 0
    %11 = vsyncpa [#allocation7], 0
    %12 = vsyncpa [#allocation5], 0
    // Predicated region
    $region2: #{tpu_custom_call.1} parent=1 // pred_check
      _
    $region3: #{tpu_custom_call.1} parent=1 // pred_check_branch
      %14 = sbr.rel (0) target = $region5
    $region4: #{tpu_custom_call.1} parent=1 // pred_region
      %s16 = ssub.s32 256, 256
      %17 = vsyncadd [#allocation4], %s16
      %s18 = sshll.u32 [#allocation3], 4
      %s19 = int_to_ptr.vmem [resolvable:$true] %s18
      %24 = dma.hbm_to_vmem [thread:$0]  %s0, 256, %s19, [#allocation4], 128, 128, 8
    $region5: #{tpu_custom_call.1} parent=1 // pred_fallthru
      _
    // Predicated region
    $region6: #{tpu_custom_call.1} parent=1 // pred_check
      _
    $region7: #{tpu_custom_call.1} parent=1 // pred_check_branch
      %26 = sbr.rel (0) target = $region9
    $region8: #{tpu_custom_call.1} parent=1 // pred_region
      %s28 = ssub.s32 2048, 2048
      %29 = vsyncadd [#allocation7], %s28
      %s30 = sshll.u32 [#allocation6], 4
      %s31 = int_to_ptr.vmem [resolvable:$true] %s30
      %36 = dma.hbm_to_vmem [thread:$0]  %s1, 2048, %s31, [#allocation7], 128, 128, 8
    $region9: #{tpu_custom_call.1} parent=1 // pred_fallthru
      _
    // Predicated region
    $region10: #{tpu_custom_call.1} parent=1 // pred_check
      _
    $region11: #{tpu_custom_call.1} parent=1 // pred_check_branch
      %38 = sbr.rel (0) target = $region13
    $region12: #{tpu_custom_call.1} parent=1 // pred_region
      _
    $region13: #{tpu_custom_call.1} parent=1 // pred_fallthru
      _
    // Predicated region
    $region14: #{tpu_custom_call.1} parent=1 // pred_check
      _
    $region15: #{tpu_custom_call.1} parent=1 // pred_check_branch
      %40 = sbr.rel (0) target = $region17
    $region16: #{tpu_custom_call.1} parent=1 // pred_region
      %s42 = ssub.s32 2048, 2048
      %43 = vsyncadd [#allocation7], %s42
      %s44 = sshll.u32 [#allocation8], 4
      %s45 = int_to_ptr.vmem [resolvable:$true] %s44
      %50 = dma.hbm_to_vmem [thread:$0]  %s3, 2048, %s45, [#allocation7], 128, 128, 8
    $region17: #{tpu_custom_call.1} parent=1 // pred_fallthru
      _
    // Predicated region
    $region18: #{tpu_custom_call.1} parent=1 // pred_check
      _
    $region19: #{tpu_custom_call.1} parent=1 // pred_check_branch
      %52 = sbr.rel (0) target = $region21
    $region20: #{tpu_custom_call.1} parent=1 // pred_region
      _
    $region21: #{tpu_custom_call.1} parent=1 // pred_fallthru
      _
    // Predicated region
    $region22: #{tpu_custom_call.1} parent=1 // pred_check
      _
    $region23: #{tpu_custom_call.1} parent=1 // pred_check_branch
      %54 = sbr.rel (0) target = $region25
    $region24: #{tpu_custom_call.1} parent=1 // pred_region
      %55 = dma.done [#allocation4], 256
    $region25: #{tpu_custom_call.1} parent=1 // pred_fallthru
      _
    // Predicated region
    $region26: #{tpu_custom_call.1} parent=1 // pred_check
      _
    $region27: #{tpu_custom_call.1} parent=1 // pred_check_branch
      %57 = sbr.rel (0) target = $region29
    $region28: #{tpu_custom_call.1} parent=1 // pred_region
      %58 = dma.done [#allocation7], 2048
    $region29: #{tpu_custom_call.1} parent=1 // pred_fallthru
      _
    // Predicated region
    $region30: #{tpu_custom_call.1} parent=1 // pred_check
      _
    $region31: #{tpu_custom_call.1} parent=1 // pred_check_branch
      %60 = sbr.rel (0) target = $region33
    $region32: #{tpu_custom_call.1} parent=1 // pred_region
      %61 = dma.done [#allocation7], 2048
    $region33: #{tpu_custom_call.1} parent=1 // pred_fallthru
      _
    %p62 = scmp.eq.s32.totalorder 0, 0
    // Predicated region
    $region34: #{tpu_custom_call.1} parent=1 // pred_check
      %p63 = pneg %p62
    $region35: #{tpu_custom_call.1} parent=1 // pred_check_branch
      %65 = sbr.rel (%p63) target = $region37
    $region36: #{tpu_custom_call.1} parent=1 // pred_region
      %66 = vst [vmem:[#allocation2] sm:$0xff] 0.0
      %67 = vst [vmem:[#allocation2 + $0x8] sm:$0xff] 0.0
    $region37: #{tpu_custom_call.1} parent=1 // pred_fallthru
      _
    %v68 = vld [vmem:[#allocation3] sm:$0xff]
    %v69 = vld [vmem:[#allocation3 + $0x8] sm:$0xff]
    %v70 = vld [vmem:[#allocation6] sm:$0xff]
    %v71 = vld [vmem:[#allocation6 + $0x8] sm:$0xff]
    %v72 = vld [vmem:[#allocation6 + $0x10] sm:$0xff]
    %v73 = vld [vmem:[#allocation6 + $0x18] sm:$0xff]
    %v74 = vld [vmem:[#allocation6 + $0x20] sm:$0xff]
    %v75 = vld [vmem:[#allocation6 + $0x28] sm:$0xff]
    %v76 = vld [vmem:[#allocation6 + $0x30] sm:$0xff]
    %v77 = vld [vmem:[#allocation6 + $0x38] sm:$0xff]
    %v78 = vld [vmem:[#allocation6 + $0x40] sm:$0xff]
    %v79 = vld [vmem:[#allocation6 + $0x48] sm:$0xff]
    %v80 = vld [vmem:[#allocation6 + $0x50] sm:$0xff]
    %v81 = vld [vmem:[#allocation6 + $0x58] sm:$0xff]
    %v82 = vld [vmem:[#allocation6 + $0x60] sm:$0xff]
    %v83 = vld [vmem:[#allocation6 + $0x68] sm:$0xff]
    %v84 = vld [vmem:[#allocation6 + $0x70] sm:$0xff]
    %v85 = vld [vmem:[#allocation6 + $0x78] sm:$0xff]
    %v86 = vld [vmem:[%s2] sm:$0x1]
    %v88 = vlaneseq
    %v89 = vshrl.u32 %v88, 7
    %v90 = vsub.s32 0, %v89
    %v91 = vrot.slane %v86, %v90
    %93 = vmatprep.subr.mxu0 0.0
    %94 = vmatpush1.msra.mxu0 %v70
    %95 = vmatprep.subr.mxu0 0.0
    %96 = vmatpush1.msra.mxu0 %v71
    %97 = vmatprep.subr.mxu0 0.0
    %98 = vmatpush1.msra.mxu0 %v72
    %99 = vmatprep.subr.mxu0 0.0
    %100 = vmatpush1.msra.mxu0 %v73
    %101 = vmatprep.subr.mxu0 0.0
    %102 = vmatpush1.msra.mxu0 %v74
    %103 = vmatprep.subr.mxu0 0.0
    %104 = vmatpush1.msra.mxu0 %v75
    %105 = vmatprep.subr.mxu0 0.0
    %106 = vmatpush1.msra.mxu0 %v76
    %107 = vmatprep.subr.mxu0 0.0
    %108 = vmatpush1.msra.mxu0 %v77
    %109 = vmatprep.subr.mxu0 0.0
    %110 = vmatpush1.msra.mxu0 %v78
    %111 = vmatprep.subr.mxu0 0.0
    %112 = vmatpush1.msra.mxu0 %v79
    %113 = vmatprep.subr.mxu0 0.0
    %114 = vmatpush1.msra.mxu0 %v80
    %115 = vmatprep.subr.mxu0 0.0
    %116 = vmatpush1.msra.mxu0 %v81
    %117 = vmatprep.subr.mxu0 0.0
    %118 = vmatpush1.msra.mxu0 %v82
    %119 = vmatprep.subr.mxu0 0.0
    %120 = vmatpush1.msra.mxu0 %v83
    %121 = vmatprep.subr.mxu0 0.0
    %122 = vmatpush1.msra.mxu0 %v84
    %123 = vmatprep.subr.mxu0 0.0
    %124 = vmatpush1.msra.mxu0 %v85
    %125 = vmatprep.subr.mxu0 0.0
    %126 = vmatpush1.msra.mxu0 0.0
    %127 = vmatprep.subr.mxu0 0.0
    %128 = vmatpush1.msra.mxu0 0.0
    %129 = vmatprep.subr.mxu0 0.0
    %130 = vmatpush1.msra.mxu0 0.0
    %131 = vmatprep.subr.mxu0 0.0
    %132 = vmatpush1.msra.mxu0 0.0
    %133 = vmatprep.subr.mxu0 0.0
    %134 = vmatpush1.msra.mxu0 0.0
    %135 = vmatprep.subr.mxu0 0.0
    %136 = vmatpush1.msra.mxu0 0.0
    %137 = vmatprep.subr.mxu0 0.0
    %138 = vmatpush1.msra.mxu0 0.0
    %139 = vmatprep.subr.mxu0 0.0
    %140 = vmatpush1.msra.mxu0 0.0
    %141 = vmatprep.subr.mxu0 0.0
    %142 = vmatpush1.msra.mxu0 0.0
    %143 = vmatprep.subr.mxu0 0.0
    %144 = vmatpush1.msra.mxu0 0.0
    %145 = vmatprep.subr.mxu0 0.0
    %146 = vmatpush1.msra.mxu0 0.0
    %147 = vmatprep.subr.mxu0 0.0
    %148 = vmatpush1.msra.mxu0 0.0
    %149 = vmatprep.subr.mxu0 0.0
    %150 = vmatpush1.msra.mxu0 0.0
    %151 = vmatprep.subr.mxu0 0.0
    %152 = vmatpush1.msra.mxu0 0.0
    %153 = vmatprep.subr.mxu0 0.0
    %154 = vmatpush1.msra.mxu0 0.0
    %155 = vmatprep.subr.mxu0 0.0
    %156 = vmatpush1.msra.mxu0 0.0
    %157 = vmatprep.mubr.f32.mxu0 0.0
    %158 = vmatmul.mubr.f32.gmra.mrb[0].mxu0 %v68
    %v159 = vpop.f32.mrb[0].mxu0
    %v160 = vadd.f32 %v91, %v159
    %v161 = vpop.f32.mrb[0].mxu0
    %162 = vmatprep.mubr.f32.mxu0 0.0
    %163 = vmatmul.mubr.f32.gmra.mrb[0].mxu0 %v69
    %v164 = vpop.f32.mrb[0].mxu0
    %v165 = vadd.f32 %v91, %v164
    %v166 = vpop.f32.mrb[0].mxu0
    %167 = vdwg.mxu0
    %v168 = vmul.f32 %v160, 0.5
    %v169 = vmul.f32 %v165, 0.5
    %v170 = vmul.f32 %v160, 0.70710677
    %v171 = vmul.f32 %v165, 0.70710677
    %v172 = verf.f32.pop %v170
    %v173 = verf.f32.pop %v171
    %v174 = vadd.f32 %v172, 1.0
    %v175 = vadd.f32 %v173, 1.0
    %v176 = vmul.f32 %v168, %v174
    %v177 = vmul.f32 %v169, %v175
    %v178 = vld [vmem:[#allocation2] sm:$0xff]
    %v179 = vld [vmem:[#allocation2 + $0x8] sm:$0xff]
    %v180 = vld [vmem:[#allocation8] sm:$0xff]
    %v181 = vld [vmem:[#allocation8 + $0x8] sm:$0xff]
    %v182 = vld [vmem:[#allocation8 + $0x10] sm:$0xff]
    %v183 = vld [vmem:[#allocation8 + $0x18] sm:$0xff]
    %v184 = vld [vmem:[#allocation8 + $0x20] sm:$0xff]
    %v185 = vld [vmem:[#allocation8 + $0x28] sm:$0xff]
    %v186 = vld [vmem:[#allocation8 + $0x30] sm:$0xff]
    %v187 = vld [vmem:[#allocation8 + $0x38] sm:$0xff]
    %v188 = vld [vmem:[#allocation8 + $0x40] sm:$0xff]
    %v189 = vld [vmem:[#allocation8 + $0x48] sm:$0xff]
    %v190 = vld [vmem:[#allocation8 + $0x50] sm:$0xff]
    %v191 = vld [vmem:[#allocation8 + $0x58] sm:$0xff]
    %v192 = vld [vmem:[#allocation8 + $0x60] sm:$0xff]
    %v193 = vld [vmem:[#allocation8 + $0x68] sm:$0xff]
    %v194 = vld [vmem:[#allocation8 + $0x70] sm:$0xff]
    %v195 = vld [vmem:[#allocation8 + $0x78] sm:$0xff]
    %196 = vmatprep.subr.mxu0 0.0
    %197 = vmatpush1.msra.mxu0 %v180
    %198 = vmatprep.subr.mxu0 0.0
    %199 = vmatpush1.msra.mxu0 %v181
    %200 = vmatprep.subr.mxu0 0.0
    %201 = vmatpush1.msra.mxu0 %v182
    %202 = vmatprep.subr.mxu0 0.0
    %203 = vmatpush1.msra.mxu0 %v183
    %204 = vmatprep.subr.mxu0 0.0
    %205 = vmatpush1.msra.mxu0 %v184
    %206 = vmatprep.subr.mxu0 0.0
    %207 = vmatpush1.msra.mxu0 %v185
    %208 = vmatprep.subr.mxu0 0.0
    %209 = vmatpush1.msra.mxu0 %v186
    %210 = vmatprep.subr.mxu0 0.0
    %211 = vmatpush1.msra.mxu0 %v187
    %212 = vmatprep.subr.mxu0 0.0
    %213 = vmatpush1.msra.mxu0 %v188
    %214 = vmatprep.subr.mxu0 0.0
    %215 = vmatpush1.msra.mxu0 %v189
    %216 = vmatprep.subr.mxu0 0.0
    %217 = vmatpush1.msra.mxu0 %v190
    %218 = vmatprep.subr.mxu0 0.0
    %219 = vmatpush1.msra.mxu0 %v191
    %220 = vmatprep.subr.mxu0 0.0
    %221 = vmatpush1.msra.mxu0 %v192
    %222 = vmatprep.subr.mxu0 0.0
    %223 = vmatpush1.msra.mxu0 %v193
    %224 = vmatprep.subr.mxu0 0.0
    %225 = vmatpush1.msra.mxu0 %v194
    %226 = vmatprep.subr.mxu0 0.0
    %227 = vmatpush1.msra.mxu0 %v195
    %228 = vmatprep.subr.mxu0 0.0
    %229 = vmatpush1.msra.mxu0 0.0
    %230 = vmatprep.subr.mxu0 0.0
    %231 = vmatpush1.msra.mxu0 0.0
    %232 = vmatprep.subr.mxu0 0.0
    %233 = vmatpush1.msra.mxu0 0.0
    %234 = vmatprep.subr.mxu0 0.0
    %235 = vmatpush1.msra.mxu0 0.0
    %236 = vmatprep.subr.mxu0 0.0
    %237 = vmatpush1.msra.mxu0 0.0
    %238 = vmatprep.subr.mxu0 0.0
    %239 = vmatpush1.msra.mxu0 0.0
    %240 = vmatprep.subr.mxu0 0.0
    %241 = vmatpush1.msra.mxu0 0.0
    %242 = vmatprep.subr.mxu0 0.0
    %243 = vmatpush1.msra.mxu0 0.0
    %244 = vmatprep.subr.mxu0 0.0
    %245 = vmatpush1.msra.mxu0 0.0
    %246 = vmatprep.subr.mxu0 0.0
    %247 = vmatpush1.msra.mxu0 0.0
    %248 = vmatprep.subr.mxu0 0.0
    %249 = vmatpush1.msra.mxu0 0.0
    %250 = vmatprep.subr.mxu0 0.0
    %251 = vmatpush1.msra.mxu0 0.0
    %252 = vmatprep.subr.mxu0 0.0
    %253 = vmatpush1.msra.mxu0 0.0
    %254 = vmatprep.subr.mxu0 0.0
    %255 = vmatpush1.msra.mxu0 0.0
    %256 = vmatprep.subr.mxu0 0.0
    %257 = vmatpush1.msra.mxu0 0.0
    %258 = vmatprep.subr.mxu0 0.0
    %259 = vmatpush1.msra.mxu0 0.0
    %260 = vmatprep.mubr.f32.mxu0 0.0
    %261 = vmatmul.mubr.f32.gmra.mrb[0].mxu0 %v176
    %v262 = vpop.f32.mrb[0].mxu0
    %v263 = vadd.f32 0.0, %v262
    %v264 = vpop.f32.mrb[0].mxu0
    %265 = vmatprep.mubr.f32.mxu0 0.0
    %266 = vmatmul.mubr.f32.gmra.mrb[0].mxu0 %v177
    %v267 = vpop.f32.mrb[0].mxu0
    %v268 = vadd.f32 0.0, %v267
    %v269 = vpop.f32.mrb[0].mxu0
    %270 = vdwg.mxu0
    %v271 = vadd.f32 %v178, %v263
    %v272 = vadd.f32 %v179, %v268
    %273 = vst [vmem:[#allocation2] sm:$0xff] %v271
    %274 = vst [vmem:[#allocation2 + $0x8] sm:$0xff] %v272
    // Predicated region
    $region38: #{tpu_custom_call.1} parent=1 // pred_check
      %p275 = pneg %p62
    $region39: #{tpu_custom_call.1} parent=1 // pred_check_branch
      %277 = sbr.rel (%p275) target = $region41
    $region40: #{tpu_custom_call.1} parent=1 // pred_region
      %v278 = vld [vmem:[#allocation2] sm:$0xff]
      %v279 = vld [vmem:[#allocation2 + $0x8] sm:$0xff]
      %v280 = vld [vmem:[%s4] sm:$0x1]
      %v282 = vlaneseq
      %v283 = vshrl.u32 %v282, 7
      %v284 = vsub.s32 0, %v283
      %v285 = vrot.slane %v280, %v284
      %v287 = vadd.f32 %v278, %v285
      %v288 = vadd.f32 %v279, %v285
      %289 = vst [vmem:[#allocation9] sm:$0xff] %v287
      %290 = vst [vmem:[#allocation9 + $0x8] sm:$0xff] %v288
    $region41: #{tpu_custom_call.1} parent=1 // pred_fallthru
      _
    // Predicated region
    $region42: #{tpu_custom_call.1} parent=1 // pred_check
      _
    $region43: #{tpu_custom_call.1} parent=1 // pred_check_branch
      %292 = sbr.rel (0) target = $region45
    $region44: #{tpu_custom_call.1} parent=1 // pred_region
      %s294 = ssub.s32 256, 256
      %295 = vsyncadd [#allocation5], %s294
      %s296 = sshll.u32 [#allocation9], 4
      %s297 = int_to_ptr.vmem [resolvable:$true] %s296
      %302 = dma.vmem_to_hbm [thread:$0]  %s297, 256, %s5, [#allocation5], 128, 128, 8
    $region45: #{tpu_custom_call.1} parent=1 // pred_fallthru
      _
    // Predicated region
    $region46: #{tpu_custom_call.1} parent=1 // pred_check
      _
    $region47: #{tpu_custom_call.1} parent=1 // pred_check_branch
      %304 = sbr.rel (0) target = $region49
    $region48: #{tpu_custom_call.1} parent=1 // pred_region
      %305 = dma.done [#allocation5], 256
    $region49: #{tpu_custom_call.1} parent=1 // pred_fallthru
      _
    %306 = vsyncpa [#allocation4], 1
    %307 = vsyncpa [#allocation7], 1
    %308 = vsyncpa [#allocation5], 1

</llo_original>
